<compile_context>
chip_gen: v7x
topology: tpu7x:2x2x1
jax: 0.10.0
libtpu: 0.0.40
codegen_flags: <defaults>
</compile_context>

<pallas_src>
import jax
import jax.numpy as jnp
from jax.experimental import pallas as pl
from jax.experimental.pallas import tpu as pltpu

FEATURE_DIM = 128
NUM_SUB = 4
OUT_PER_UNIT = FEATURE_DIM // NUM_SUB     # 32
HID_PACKED = NUM_SUB * FEATURE_DIM        # 512 (four 128-wide hiddens side by side)
MAX_BATCH_TILE = 1024                     # ~8 MiB live footprint; fits every chip's scoped VMEM


def _round_up(x, m):
    return ((x + m - 1) // m) * m


def _attention_kernel(vx_ref, ax_ref, w1_ref, b1_ref, w2_ref, b2_ref, out_ref):
    """One batch tile of the fused AttentionModule3_2 forward (bf16 MXU, f32 epilogue)."""
    # cat([vx, ax], -1): lane-dim concat of two lane-aligned 128-wide tiles, cast to
    # bf16 for the MXU (weights are already bf16 in HBM/VMEM).
    x = jnp.concatenate([vx_ref[...], ax_ref[...]], axis=-1).astype(jnp.bfloat16)  # (tb, 256)

    # all four fc1 layers in one K=256 / N=512 bf16 MXU dot, f32 accumulate.
    h = jnp.dot(x, w1_ref[...], preferred_element_type=jnp.float32) + b1_ref[...]
    h = jnp.maximum(h, 0.0).astype(jnp.bfloat16)                                   # (tb, 512)

    # all four fc2 heads as one block-diagonal K=512 / N=128 dot; the result is
    # already the concatenation over sub-attention units -> lane-dense f32 store.
    o = jnp.dot(h, w2_ref[...], preferred_element_type=jnp.float32) + b2_ref[...]
    out_ref[...] = jnp.maximum(o, 0.0)                                             # (tb, 128)


def init_unit_params(key, feature_dim=FEATURE_DIM, num_sub=NUM_SUB):
    """PyTorch-Linear-style init: U(-1/sqrt(fan_in), +1/sqrt(fan_in)); weights stored (in, out)."""
    out_dim = feature_dim // num_sub

    def linear(k, fan_in, fan_out):
        kw, kb = jax.random.split(k)
        bound = 1.0 / (fan_in ** 0.5)
        w = jax.random.uniform(kw, (fan_in, fan_out), jnp.float32, -bound, bound)
        b = jax.random.uniform(kb, (fan_out,), jnp.float32, -bound, bound)
        return w, b

    keys = jax.random.split(key, 2 * num_sub)
    units = []
    for n in range(num_sub):
        w1, b1 = linear(keys[2 * n], 2 * feature_dim, feature_dim)   # fc1: (256, 128)
        w2, b2 = linear(keys[2 * n + 1], feature_dim, out_dim)       # fc2: (128, 32)
        units.append((w1, b1, w2, b2))
    return units


def pack_params(unit_params, feature_dim=FEATURE_DIM, num_sub=NUM_SUB):
    """Pack 4x(fc1, fc2) into two bf16 weight slabs + two f32 bias rows."""
    out_dim = feature_dim // num_sub
    w1_packed = jnp.concatenate([u[0] for u in unit_params], axis=1)               # (2F, 4F)
    b1_packed = jnp.concatenate([u[1] for u in unit_params], axis=0)[None, :]      # (1, 4F)

    # block-diagonal fc2: rows n*F:(n+1)*F feed only columns n*32:(n+1)*32
    block_rows = []
    for n in range(num_sub):
        row = [jnp.zeros((feature_dim, out_dim), jnp.float32) for _ in range(num_sub)]
        row[n] = unit_params[n][2]
        block_rows.append(jnp.concatenate(row, axis=1))                            # (F, F)
    w2_packed = jnp.concatenate(block_rows, axis=0)                                # (4F, F)
    b2_packed = jnp.concatenate([u[3] for u in unit_params], axis=0)[None, :]      # (1, F)

    return (w1_packed.astype(jnp.bfloat16), b1_packed.astype(jnp.float32),
            w2_packed.astype(jnp.bfloat16), b2_packed.astype(jnp.float32))


def reference_forward(vx, ax, unit_params):
    """Plain-JAX f32 re-implementation of the PyTorch forward (for validation)."""
    x = jnp.concatenate([vx, ax], axis=-1)
    outs = []
    for (w1, b1, w2, b2) in unit_params:
        h = jax.nn.relu(x @ w1 + b1)
        outs.append(jax.nn.relu(h @ w2 + b2))
    return jnp.concatenate(outs, axis=-1)


def reference_forward_bf16(vx, ax, unit_params):
    """Plain-JAX reference following the exact bf16-operand / f32-accumulate path of the kernel."""
    x = jnp.concatenate([vx, ax], axis=-1).astype(jnp.bfloat16)
    outs = []
    for (w1, b1, w2, b2) in unit_params:
        h = jnp.dot(x, w1.astype(jnp.bfloat16), preferred_element_type=jnp.float32) + b1
        h = jnp.maximum(h, 0.0).astype(jnp.bfloat16)
        o = jnp.dot(h, w2.astype(jnp.bfloat16), preferred_element_type=jnp.float32) + b2
        outs.append(jnp.maximum(o, 0.0))
    return jnp.concatenate(outs, axis=-1)


def attention_module_forward(vx, ax, packed_params):
    w1, b1, w2, b2 = packed_params
    B_in, F = vx.shape
    two_f, hid = w1.shape          # (256, 512)
    out_f = w2.shape[1]            # 128

    # Tiny-batch fallback only (keeps the (tb, 128) block sublane-legal).  No padding
    # is done in the common case: ragged last tiles are handled by Mosaic's clipped
    # partial-block DMA/writeback, so we avoid an extra HBM pass over vx/ax.
    B = B_in
    if B < 8:
        pad = ((0, 8 - B), (0, 0))
        vx = jnp.pad(vx, pad)
        ax = jnp.pad(ax, pad)
        B = 8

    # Tile: as large as possible (amortize per-step overhead, big DMAs), but capped
    # so the batch grid has >=2 steps whenever B allows it -> both v7x TensorCores
    # get work via the "parallel" batch axis.  Always a multiple of 8 sublanes.
    tb = min(MAX_BATCH_TILE, _round_up(pl.cdiv(B, 2), 8))
    grid = (pl.cdiv(B, tb),)

    flops = int(2 * B * (two_f * hid + hid * out_f))
    bytes_accessed = int(
        4 * B * (2 * F + out_f)            # f32 vx, ax, out
        + 2 * (w1.size + w2.size)          # bf16 weight slabs
        + 4 * (b1.size + b2.size)          # f32 biases
    )
    cost = pl.CostEstimate(flops=flops, transcendentals=0, bytes_accessed=bytes_accessed)

    out = pl.pallas_call(
        _attention_kernel,
        out_shape=jax.ShapeDtypeStruct((B, out_f), jnp.float32),
        grid_spec=pltpu.PrefetchScalarGridSpec(
            num_scalar_prefetch=0,
            grid=grid,
            in_specs=[
                pl.BlockSpec((tb, F), lambda i: (i, 0)),        # vx tile
                pl.BlockSpec((tb, F), lambda i: (i, 0)),        # ax tile
                pl.BlockSpec((two_f, hid), lambda i: (0, 0)),   # packed fc1 weights (VMEM-resident)
                pl.BlockSpec((1, hid), lambda i: (0, 0)),       # packed fc1 bias
                pl.BlockSpec((hid, out_f), lambda i: (0, 0)),   # block-diag fc2 weights (VMEM-resident)
                pl.BlockSpec((1, out_f), lambda i: (0, 0)),     # packed fc2 bias
            ],
            out_specs=pl.BlockSpec((tb, out_f), lambda i: (i, 0)),
        ),
        compiler_params=pltpu.CompilerParams(dimension_semantics=("parallel",)),
        cost_estimate=cost,
    )(vx, ax, w1, b1, w2, b2)

    return out[:B_in] if B_in != B else out


if __name__ == "__main__":
    key = jax.random.PRNGKey(0)
    kp, kv, ka, kv2, ka2 = jax.random.split(key, 5)

    unit_params = init_unit_params(kp)
    packed = pack_params(unit_params)

    # small primary check (single grid step)
    B = 8
    vx = jax.random.normal(kv, (B, FEATURE_DIM), dtype=jnp.float32)
    ax = jax.random.normal(ka, (B, FEATURE_DIM), dtype=jnp.float32)
    out = attention_module_forward(vx, ax, packed)
    jax.block_until_ready(out)
    assert out.shape == (B, FEATURE_DIM)
    ref_bf16 = reference_forward_bf16(vx, ax, unit_params)
    assert jnp.max(jnp.abs(out - ref_bf16)) < 2e-3, "mismatch vs bf16-path reference (B=8)"
    ref_f32 = reference_forward(vx, ax, unit_params)
    assert jnp.max(jnp.abs(out - ref_f32)) < 5e-2, "mismatch vs f32 reference (B=8)"

    # exercise multi-tile grid with a ragged (partial) last batch tile
    B2 = 260
    vx2 = jax.random.normal(kv2, (B2, FEATURE_DIM), dtype=jnp.float32)
    ax2 = jax.random.normal(ka2, (B2, FEATURE_DIM), dtype=jnp.float32)
    out2 = attention_module_forward(vx2, ax2, packed)
    jax.block_until_ready(out2)
    assert out2.shape == (B2, FEATURE_DIM)
    ref2_bf16 = reference_forward_bf16(vx2, ax2, unit_params)
    assert jnp.max(jnp.abs(out2 - ref2_bf16)) < 2e-3, "mismatch vs bf16-path reference (B=260)"
    ref2_f32 = reference_forward(vx2, ax2, unit_params)
    assert jnp.max(jnp.abs(out2 - ref2_f32)) < 5e-2, "mismatch vs f32 reference (B=260)"

    print("KERNEL_OK")
</pallas_src>

<mosaic_0001>
module attributes {stable_mosaic.version = 11 : i64} {
  func.func @_attention_kernel(%arg0: i32, %arg1: memref<8x128xf32, #tpu.memory_space<vmem>>, %arg2: memref<8x128xf32, #tpu.memory_space<vmem>>, %arg3: memref<256x512xbf16, #tpu.memory_space<vmem>>, %arg4: memref<1x512xf32, #tpu.memory_space<vmem>>, %arg5: memref<512x128xbf16, #tpu.memory_space<vmem>>, %arg6: memref<1x128xf32, #tpu.memory_space<vmem>>, %arg7: memref<8x128xf32, #tpu.memory_space<vmem>>) attributes {dimension_semantics = [#tpu.dimension_semantics<parallel>], iteration_bounds = array<i64: 1>, scalar_prefetch = 0 : i64, scratch_operands = 0 : i64, tpu.core_type = #tpu.core_type<tc>, window_params = [{transform_indices = @transform_0, window_bounds = array<i64: 8, 128>}, {transform_indices = @transform_1, window_bounds = array<i64: 8, 128>}, {pipeline_mode = #tpu.pipeline_mode<synchronous>, transform_indices = @transform_2, window_bounds = array<i64: 256, 512>}, {pipeline_mode = #tpu.pipeline_mode<synchronous>, transform_indices = @transform_3, window_bounds = array<i64: 1, 512>}, {pipeline_mode = #tpu.pipeline_mode<synchronous>, transform_indices = @transform_4, window_bounds = array<i64: 512, 128>}, {pipeline_mode = #tpu.pipeline_mode<synchronous>, transform_indices = @transform_5, window_bounds = array<i64: 1, 128>}, {transform_indices = @transform_6, window_bounds = array<i64: 8, 128>}]} {
    %c0 = arith.constant 0 : index
    %c0_0 = arith.constant 0 : index
    %0 = vector.load %arg1[%c0, %c0_0] : memref<8x128xf32, #tpu.memory_space<vmem>>, vector<8x128xf32>
    %c0_1 = arith.constant 0 : index
    %c0_2 = arith.constant 0 : index
    %1 = vector.load %arg2[%c0_1, %c0_2] : memref<8x128xf32, #tpu.memory_space<vmem>>, vector<8x128xf32>
    %2 = tpu.concatenate %0, %1 in 1 : vector<8x128xf32>, vector<8x128xf32> -> vector<8x256xf32>
    %3 = arith.truncf %2 : vector<8x256xf32> to vector<8x256xbf16>
    %c0_3 = arith.constant 0 : index
    %c0_4 = arith.constant 0 : index
    %4 = vector.load %arg3[%c0_3, %c0_4] : memref<256x512xbf16, #tpu.memory_space<vmem>>, vector<256x512xbf16>
    %cst = arith.constant dense<0.000000e+00> : vector<8x512xf32>
    %5 = tpu.matmul %3, %4, %cst {dimension_numbers = #tpu.dot_dimension_numbers<[1], [0], [0], [1], [0, 0, 1, 1], [], []>} : vector<8x256xbf16>, vector<256x512xbf16>, vector<8x512xf32> -> vector<8x512xf32>
    %c0_5 = arith.constant 0 : index
    %c0_6 = arith.constant 0 : index
    %6 = vector.load %arg4[%c0_5, %c0_6] : memref<1x512xf32, #tpu.memory_space<vmem>>, vector<1x512xf32>
    %7 = vector.broadcast %6 : vector<1x512xf32> to vector<8x512xf32>
    %8 = arith.addf %5, %7 : vector<8x512xf32>
    %cst_7 = arith.constant 0.000000e+00 : f32
    %9 = vector.broadcast %cst_7 : f32 to vector<8x512xf32>
    %10 = arith.maximumf %8, %9 : vector<8x512xf32>
    %11 = arith.truncf %10 : vector<8x512xf32> to vector<8x512xbf16>
    %c0_8 = arith.constant 0 : index
    %c0_9 = arith.constant 0 : index
    %12 = vector.load %arg5[%c0_8, %c0_9] : memref<512x128xbf16, #tpu.memory_space<vmem>>, vector<512x128xbf16>
    %cst_10 = arith.constant dense<0.000000e+00> : vector<8x128xf32>
    %13 = tpu.matmul %11, %12, %cst_10 {dimension_numbers = #tpu.dot_dimension_numbers<[1], [0], [0], [1], [0, 0, 1, 1], [], []>} : vector<8x512xbf16>, vector<512x128xbf16>, vector<8x128xf32> -> vector<8x128xf32>
    %c0_11 = arith.constant 0 : index
    %c0_12 = arith.constant 0 : index
    %14 = vector.load %arg6[%c0_11, %c0_12] : memref<1x128xf32, #tpu.memory_space<vmem>>, vector<1x128xf32>
    %15 = vector.broadcast %14 : vector<1x128xf32> to vector<8x128xf32>
    %16 = arith.addf %13, %15 : vector<8x128xf32>
    %cst_13 = arith.constant 0.000000e+00 : f32
    %17 = vector.broadcast %cst_13 : f32 to vector<8x128xf32>
    %18 = arith.maximumf %16, %17 : vector<8x128xf32>
    %c0_14 = arith.constant 0 : index
    %c0_15 = arith.constant 0 : index
    %19 = vector.load %arg7[%c0_14, %c0_15] : memref<8x128xf32, #tpu.memory_space<vmem>>, vector<8x128xf32>
    tpu.vector_store %arg7[%c0_14, %c0_15], %18 {strides = array<i32>} : memref<8x128xf32, #tpu.memory_space<vmem>>, vector<8x128xf32>,
    return
  }
  func.func @transform_0(%arg0: i32) -> (i32, i32) {
    %c0_i32 = arith.constant 0 : i32
    %c0_i32_0 = arith.constant 0 : i32
    return %arg0, %c0_i32 : i32, i32
  }
  func.func @transform_1(%arg0: i32) -> (i32, i32) {
    %c0_i32 = arith.constant 0 : i32
    %c0_i32_0 = arith.constant 0 : i32
    return %arg0, %c0_i32 : i32, i32
  }
  func.func @transform_2(%arg0: i32) -> (i32, i32) {
    %c0_i32 = arith.constant 0 : i32
    %c0_i32_0 = arith.constant 0 : i32
    %c0_i32_1 = arith.constant 0 : i32
    return %c0_i32, %c0_i32_0 : i32, i32
  }
  func.func @transform_3(%arg0: i32) -> (i32, i32) {
    %c0_i32 = arith.constant 0 : i32
    %c0_i32_0 = arith.constant 0 : i32
    %c0_i32_1 = arith.constant 0 : i32
    return %c0_i32, %c0_i32_0 : i32, i32
  }
  func.func @transform_4(%arg0: i32) -> (i32, i32) {
    %c0_i32 = arith.constant 0 : i32
    %c0_i32_0 = arith.constant 0 : i32
    %c0_i32_1 = arith.constant 0 : i32
    return %c0_i32, %c0_i32_0 : i32, i32
  }
  func.func @transform_5(%arg0: i32) -> (i32, i32) {
    %c0_i32 = arith.constant 0 : i32
    %c0_i32_0 = arith.constant 0 : i32
    %c0_i32_1 = arith.constant 0 : i32
    return %c0_i32, %c0_i32_0 : i32, i32
  }
  func.func @transform_6(%arg0: i32) -> (i32, i32) {
    %c0_i32 = arith.constant 0 : i32
    %c0_i32_0 = arith.constant 0 : i32
    return %arg0, %c0_i32 : i32, i32
  }
}

</mosaic_0001>

<llo_original>
// kernel: tpu_custom_call.1
$region0: #{tpu_custom_call.1}
  #allocation0 [shape = 'u32[]', space=smem, size = 0x4, offset = 0x4, fixed_abs, tag = 'smem constant byte address 0x4 - core index']
  #allocation1 [shape = 'u32[144,128]{1,0:T(1,128)}', space=vmem, size = 0x12000, scoped, tag = 'internal scratch']
  %s0 = inlined_call_operand.hbm [shape: f32[8,128], index: 0, kind: input, shape index: {}]
  %s1 = inlined_call_operand.hbm [shape: f32[8,128], index: 1, kind: input, shape index: {}]
  %s2 = inlined_call_operand.hbm [shape: bf16[256,512], index: 2, kind: input, shape index: {}]
  %s3 = inlined_call_operand.vmem [shape: f32[1,512], index: 3, kind: input, shape index: {}]
  %s4 = inlined_call_operand.hbm [shape: bf16[512,128], index: 4, kind: input, shape index: {}]
  %s5 = inlined_call_operand.vmem [shape: f32[1,128], index: 5, kind: input, shape index: {}]
  %s6 = inlined_call_operand.hbm [shape: f32[8,128], index: 6, kind: output, shape index: {}]
  %s7 = sld [smem:[#allocation0]]
  $region50: #{tpu_custom_call.1} parent=0
    _
  %s9 = ssub.s32 1, %s7
  %s10 = scalar_select 0, %s9, %s7
  $region1: #{tpu_custom_call.1} parent=0
    #allocation2 [shape = 'u8[4096]{0}', space=vmem, size = 0x1000, scoped, tag = 'input window, operand 0, single buffered']
    #allocation3 [shape = 's32[1]{0}', space=sflag, size = 0x4, scoped, tag = 'scoped memory for tpu_custom_call.1']
    #allocation4 [shape = 's32[1]{0}', space=sflag, size = 0x4, scoped, tag = 'scoped memory for tpu_custom_call.1']
    #allocation5 [shape = 'u8[4096]{0}', space=vmem, size = 0x1000, scoped, tag = 'input window, operand 1, single buffered']
    #allocation6 [shape = 's32[1]{0}', space=sflag, size = 0x4, scoped, tag = 'scoped memory for tpu_custom_call.1']
    #allocation7 [shape = 'u8[262144]{0}', space=vmem, size = 0x40000, scoped, tag = 'input window, operand 2, single buffered']
    #allocation8 [shape = 'u8[131072]{0}', space=vmem, size = 0x20000, scoped, tag = 'input window, operand 4, single buffered']
    #allocation9 [shape = 's32[1]{0}', space=sflag, size = 0x4, scoped, tag = 'scoped memory for tpu_custom_call.1']
    #allocation10 [shape = 'u8[4096]{0}', space=vmem, size = 0x1000, scoped, tag = 'output window, operand 0, single buffered']
    %11 = vsyncpa [#allocation3], 0
    %12 = vsyncpa [#allocation6], 0
    %13 = vsyncpa [#allocation9], 0
    %14 = vsyncpa [#allocation4], 0
    // Predicated region
    $region2: #{tpu_custom_call.1} parent=1 // pred_check
      _
    $region3: #{tpu_custom_call.1} parent=1 // pred_check_branch
      %16 = sbr.rel (0) target = $region5
    $region4: #{tpu_custom_call.1} parent=1 // pred_region
      %s18 = ssub.s32 128, 128
      %19 = vsyncadd [#allocation3], %s18
      %s21 = sshll.u32 [#allocation2], 4
      %s22 = int_to_ptr.vmem [resolvable:$true] %s21
      %24 = dma.hbm_to_vmem [thread:$0]  %s0, 128, %s22, [#allocation3]
    $region5: #{tpu_custom_call.1} parent=1 // pred_fallthru
      _
    // Predicated region
    $region6: #{tpu_custom_call.1} parent=1 // pred_check
      _
    $region7: #{tpu_custom_call.1} parent=1 // pred_check_branch
      %26 = sbr.rel (0) target = $region9
    $region8: #{tpu_custom_call.1} parent=1 // pred_region
      %s28 = ssub.s32 128, 128
      %29 = vsyncadd [#allocation6], %s28
      %s31 = sshll.u32 [#allocation5], 4
      %s32 = int_to_ptr.vmem [resolvable:$true] %s31
      %34 = dma.hbm_to_vmem [thread:$0]  %s1, 128, %s32, [#allocation6]
    $region9: #{tpu_custom_call.1} parent=1 // pred_fallthru
      _
    // Predicated region
    $region10: #{tpu_custom_call.1} parent=1 // pred_check
      _
    $region11: #{tpu_custom_call.1} parent=1 // pred_check_branch
      %36 = sbr.rel (0) target = $region13
    $region12: #{tpu_custom_call.1} parent=1 // pred_region
      %s38 = ssub.s32 8192, 8192
      %39 = vsyncadd [#allocation6], %s38
      %s40 = sshll.u32 [#allocation7], 4
      %s41 = int_to_ptr.vmem [resolvable:$true] %s40
      %46 = dma.hbm_to_vmem [thread:$0]  %s2, 8192, %s41, [#allocation6], 256, 256, 16
    $region13: #{tpu_custom_call.1} parent=1 // pred_fallthru
      _
    // Predicated region
    $region14: #{tpu_custom_call.1} parent=1 // pred_check
      _
    $region15: #{tpu_custom_call.1} parent=1 // pred_check_branch
      %48 = sbr.rel (0) target = $region17
    $region16: #{tpu_custom_call.1} parent=1 // pred_region
      _
    $region17: #{tpu_custom_call.1} parent=1 // pred_fallthru
      _
    // Predicated region
    $region18: #{tpu_custom_call.1} parent=1 // pred_check
      _
    $region19: #{tpu_custom_call.1} parent=1 // pred_check_branch
      %50 = sbr.rel (0) target = $region21
    $region20: #{tpu_custom_call.1} parent=1 // pred_region
      %s52 = ssub.s32 4096, 4096
      %53 = vsyncadd [#allocation9], %s52
      %s54 = sshll.u32 [#allocation8], 4
      %s55 = int_to_ptr.vmem [resolvable:$true] %s54
      %60 = dma.hbm_to_vmem [thread:$0]  %s4, 4096, %s55, [#allocation9], 64, 64, 4
    $region21: #{tpu_custom_call.1} parent=1 // pred_fallthru
      _
    // Predicated region
    $region22: #{tpu_custom_call.1} parent=1 // pred_check
      _
    $region23: #{tpu_custom_call.1} parent=1 // pred_check_branch
      %62 = sbr.rel (0) target = $region25
    $region24: #{tpu_custom_call.1} parent=1 // pred_region
      _
    $region25: #{tpu_custom_call.1} parent=1 // pred_fallthru
      _
    // Predicated region
    $region26: #{tpu_custom_call.1} parent=1 // pred_check
      _
    $region27: #{tpu_custom_call.1} parent=1 // pred_check_branch
      %64 = sbr.rel (0) target = $region29
    $region28: #{tpu_custom_call.1} parent=1 // pred_region
      %65 = dma.done [#allocation3], 128
    $region29: #{tpu_custom_call.1} parent=1 // pred_fallthru
      _
    // Predicated region
    $region30: #{tpu_custom_call.1} parent=1 // pred_check
      _
    $region31: #{tpu_custom_call.1} parent=1 // pred_check_branch
      %67 = sbr.rel (0) target = $region33
    $region32: #{tpu_custom_call.1} parent=1 // pred_region
      %68 = dma.done [#allocation6], 128
    $region33: #{tpu_custom_call.1} parent=1 // pred_fallthru
      _
    // Predicated region
    $region34: #{tpu_custom_call.1} parent=1 // pred_check
      _
    $region35: #{tpu_custom_call.1} parent=1 // pred_check_branch
      %70 = sbr.rel (0) target = $region37
    $region36: #{tpu_custom_call.1} parent=1 // pred_region
      %71 = dma.done [#allocation6], 8192
    $region37: #{tpu_custom_call.1} parent=1 // pred_fallthru
      _
    // Predicated region
    $region38: #{tpu_custom_call.1} parent=1 // pred_check
      _
    $region39: #{tpu_custom_call.1} parent=1 // pred_check_branch
      %73 = sbr.rel (0) target = $region41
    $region40: #{tpu_custom_call.1} parent=1 // pred_region
      %74 = dma.done [#allocation9], 4096
    $region41: #{tpu_custom_call.1} parent=1 // pred_fallthru
      _
    %v76 = vld [vmem:[#allocation2] sm:$0xff]
    %v77 = vld [vmem:[#allocation5] sm:$0xff]
    %v78 = vpack.c.bf16 %v76, %v76
    %v79 = vpack.c.bf16 %v77, %v77
    %v80 = vld [vmem:[#allocation7] sm:$0xff]
    %v81 = vld [vmem:[#allocation7 + $0x8] sm:$0xff]
    %v82 = vld [vmem:[#allocation7 + $0x10] sm:$0xff]
    %v83 = vld [vmem:[#allocation7 + $0x18] sm:$0xff]
    %v84 = vld [vmem:[#allocation7 + $0x20] sm:$0xff]
    %v85 = vld [vmem:[#allocation7 + $0x28] sm:$0xff]
    %v86 = vld [vmem:[#allocation7 + $0x30] sm:$0xff]
    %v87 = vld [vmem:[#allocation7 + $0x38] sm:$0xff]
    %v88 = vld [vmem:[#allocation7 + $0x40] sm:$0xff]
    %v89 = vld [vmem:[#allocation7 + $0x48] sm:$0xff]
    %v90 = vld [vmem:[#allocation7 + $0x50] sm:$0xff]
    %v91 = vld [vmem:[#allocation7 + $0x58] sm:$0xff]
    %v92 = vld [vmem:[#allocation7 + $0x60] sm:$0xff]
    %v93 = vld [vmem:[#allocation7 + $0x68] sm:$0xff]
    %v94 = vld [vmem:[#allocation7 + $0x70] sm:$0xff]
    %v95 = vld [vmem:[#allocation7 + $0x78] sm:$0xff]
    %v96 = vld [vmem:[#allocation7 + $0x80] sm:$0xff]
    %v97 = vld [vmem:[#allocation7 + $0x88] sm:$0xff]
    %v98 = vld [vmem:[#allocation7 + $0x90] sm:$0xff]
    %v99 = vld [vmem:[#allocation7 + $0x98] sm:$0xff]
    %v100 = vld [vmem:[#allocation7 + $0xa0] sm:$0xff]
    %v101 = vld [vmem:[#allocation7 + $0xa8] sm:$0xff]
    %v102 = vld [vmem:[#allocation7 + $0xb0] sm:$0xff]
    %v103 = vld [vmem:[#allocation7 + $0xb8] sm:$0xff]
    %v104 = vld [vmem:[#allocation7 + $0xc0] sm:$0xff]
    %v105 = vld [vmem:[#allocation7 + $0xc8] sm:$0xff]
    %v106 = vld [vmem:[#allocation7 + $0xd0] sm:$0xff]
    %v107 = vld [vmem:[#allocation7 + $0xd8] sm:$0xff]
    %v108 = vld [vmem:[#allocation7 + $0xe0] sm:$0xff]
    %v109 = vld [vmem:[#allocation7 + $0xe8] sm:$0xff]
    %v110 = vld [vmem:[#allocation7 + $0xf0] sm:$0xff]
    %v111 = vld [vmem:[#allocation7 + $0xf8] sm:$0xff]
    %v112 = vld [vmem:[#allocation7 + $0x100] sm:$0xff]
    %v113 = vld [vmem:[#allocation7 + $0x108] sm:$0xff]
    %v114 = vld [vmem:[#allocation7 + $0x110] sm:$0xff]
    %v115 = vld [vmem:[#allocation7 + $0x118] sm:$0xff]
    %v116 = vld [vmem:[#allocation7 + $0x120] sm:$0xff]
    %v117 = vld [vmem:[#allocation7 + $0x128] sm:$0xff]
    %v118 = vld [vmem:[#allocation7 + $0x130] sm:$0xff]
    %v119 = vld [vmem:[#allocation7 + $0x138] sm:$0xff]
    %v120 = vld [vmem:[#allocation7 + $0x140] sm:$0xff]
    %v121 = vld [vmem:[#allocation7 + $0x148] sm:$0xff]
    %v122 = vld [vmem:[#allocation7 + $0x150] sm:$0xff]
    %v123 = vld [vmem:[#allocation7 + $0x158] sm:$0xff]
    %v124 = vld [vmem:[#allocation7 + $0x160] sm:$0xff]
    %v125 = vld [vmem:[#allocation7 + $0x168] sm:$0xff]
    %v126 = vld [vmem:[#allocation7 + $0x170] sm:$0xff]
    %v127 = vld [vmem:[#allocation7 + $0x178] sm:$0xff]
    %v128 = vld [vmem:[#allocation7 + $0x180] sm:$0xff]
    %v129 = vld [vmem:[#allocation7 + $0x188] sm:$0xff]
    %v130 = vld [vmem:[#allocation7 + $0x190] sm:$0xff]
    %v131 = vld [vmem:[#allocation7 + $0x198] sm:$0xff]
    %v132 = vld [vmem:[#allocation7 + $0x1a0] sm:$0xff]
    %v133 = vld [vmem:[#allocation7 + $0x1a8] sm:$0xff]
    %v134 = vld [vmem:[#allocation7 + $0x1b0] sm:$0xff]
    %v135 = vld [vmem:[#allocation7 + $0x1b8] sm:$0xff]
    %v136 = vld [vmem:[#allocation7 + $0x1c0] sm:$0xff]
    %v137 = vld [vmem:[#allocation7 + $0x1c8] sm:$0xff]
    %v138 = vld [vmem:[#allocation7 + $0x1d0] sm:$0xff]
    %v139 = vld [vmem:[#allocation7 + $0x1d8] sm:$0xff]
    %v140 = vld [vmem:[#allocation7 + $0x1e0] sm:$0xff]
    %v141 = vld [vmem:[#allocation7 + $0x1e8] sm:$0xff]
    %v142 = vld [vmem:[#allocation7 + $0x1f0] sm:$0xff]
    %v143 = vld [vmem:[#allocation7 + $0x1f8] sm:$0xff]
    %v144 = vld [vmem:[%s3] sm:$0xf]
    %v146 = vlaneseq
    %v147 = vshrl.u32 %v146, 7
    %v148 = vsub.s32 0, %v147
    %v149 = vrot.slane %v144, %v148
    %v150 = vlaneseq
    %v151 = vshrl.u32 %v150, 7
    %v152 = vsub.s32 1, %v151
    %v153 = vrot.slane %v144, %v152
    %v154 = vlaneseq
    %v155 = vshrl.u32 %v154, 7
    %v156 = vsub.s32 2, %v155
    %v157 = vrot.slane %v144, %v156
    %v158 = vlaneseq
    %v159 = vshrl.u32 %v158, 7
    %v160 = vsub.s32 3, %v159
    %v161 = vrot.slane %v144, %v160
    %v230 = vunpack.c.l.b16 %v80
    %v231 = vunpack.c.h.b16 %v80
    %v232 = vunpack.c.l.b16 %v81
    %v233 = vunpack.c.h.b16 %v81
    %v234 = vunpack.c.l.b16 %v82
    %v235 = vunpack.c.h.b16 %v82
    %v236 = vunpack.c.l.b16 %v83
    %v237 = vunpack.c.h.b16 %v83
    %v238 = vunpack.c.l.b16 %v84
    %v239 = vunpack.c.h.b16 %v84
    %v240 = vunpack.c.l.b16 %v85
    %v241 = vunpack.c.h.b16 %v85
    %v242 = vunpack.c.l.b16 %v86
    %v243 = vunpack.c.h.b16 %v86
    %v244 = vunpack.c.l.b16 %v87
    %v245 = vunpack.c.h.b16 %v87
    %v246 = vunpack.c.l.b16 %v88
    %v247 = vunpack.c.h.b16 %v88
    %v248 = vunpack.c.l.b16 %v89
    %v249 = vunpack.c.h.b16 %v89
    %v250 = vunpack.c.l.b16 %v90
    %v251 = vunpack.c.h.b16 %v90
    %v252 = vunpack.c.l.b16 %v91
    %v253 = vunpack.c.h.b16 %v91
    %v254 = vunpack.c.l.b16 %v92
    %v255 = vunpack.c.h.b16 %v92
    %v256 = vunpack.c.l.b16 %v93
    %v257 = vunpack.c.h.b16 %v93
    %v258 = vunpack.c.l.b16 %v94
    %v259 = vunpack.c.h.b16 %v94
    %v260 = vunpack.c.l.b16 %v95
    %v261 = vunpack.c.h.b16 %v95
    %v262 = vunpack.c.l.b16 %v96
    %v263 = vunpack.c.h.b16 %v96
    %v264 = vunpack.c.l.b16 %v97
    %v265 = vunpack.c.h.b16 %v97
    %v266 = vunpack.c.l.b16 %v98
    %v267 = vunpack.c.h.b16 %v98
    %v268 = vunpack.c.l.b16 %v99
    %v269 = vunpack.c.h.b16 %v99
    %v270 = vunpack.c.l.b16 %v100
    %v271 = vunpack.c.h.b16 %v100
    %v272 = vunpack.c.l.b16 %v101
    %v273 = vunpack.c.h.b16 %v101
    %v274 = vunpack.c.l.b16 %v102
    %v275 = vunpack.c.h.b16 %v102
    %v276 = vunpack.c.l.b16 %v103
    %v277 = vunpack.c.h.b16 %v103
    %v278 = vunpack.c.l.b16 %v104
    %v279 = vunpack.c.h.b16 %v104
    %v280 = vunpack.c.l.b16 %v105
    %v281 = vunpack.c.h.b16 %v105
    %v282 = vunpack.c.l.b16 %v106
    %v283 = vunpack.c.h.b16 %v106
    %v284 = vunpack.c.l.b16 %v107
    %v285 = vunpack.c.h.b16 %v107
    %v286 = vunpack.c.l.b16 %v108
    %v287 = vunpack.c.h.b16 %v108
    %v288 = vunpack.c.l.b16 %v109
    %v289 = vunpack.c.h.b16 %v109
    %v290 = vunpack.c.l.b16 %v110
    %v291 = vunpack.c.h.b16 %v110
    %v292 = vunpack.c.l.b16 %v111
    %v293 = vunpack.c.h.b16 %v111
    %v294 = vunpack.c.l.b16 %v112
    %v295 = vunpack.c.h.b16 %v112
    %v296 = vunpack.c.l.b16 %v113
    %v297 = vunpack.c.h.b16 %v113
    %v298 = vunpack.c.l.b16 %v114
    %v299 = vunpack.c.h.b16 %v114
    %v300 = vunpack.c.l.b16 %v115
    %v301 = vunpack.c.h.b16 %v115
    %v302 = vunpack.c.l.b16 %v116
    %v303 = vunpack.c.h.b16 %v116
    %v304 = vunpack.c.l.b16 %v117
    %v305 = vunpack.c.h.b16 %v117
    %v306 = vunpack.c.l.b16 %v118
    %v307 = vunpack.c.h.b16 %v118
    %v308 = vunpack.c.l.b16 %v119
    %v309 = vunpack.c.h.b16 %v119
    %v310 = vunpack.c.l.b16 %v120
    %v311 = vunpack.c.h.b16 %v120
    %v312 = vunpack.c.l.b16 %v121
    %v313 = vunpack.c.h.b16 %v121
    %v314 = vunpack.c.l.b16 %v122
    %v315 = vunpack.c.h.b16 %v122
    %v316 = vunpack.c.l.b16 %v123
    %v317 = vunpack.c.h.b16 %v123
    %v318 = vunpack.c.l.b16 %v124
    %v319 = vunpack.c.h.b16 %v124
    %v320 = vunpack.c.l.b16 %v125
    %v321 = vunpack.c.h.b16 %v125
    %v322 = vunpack.c.l.b16 %v126
    %v323 = vunpack.c.h.b16 %v126
    %v324 = vunpack.c.l.b16 %v127
    %v325 = vunpack.c.h.b16 %v127
    %v326 = vunpack.c.l.b16 %v128
    %v327 = vunpack.c.h.b16 %v128
    %v328 = vunpack.c.l.b16 %v129
    %v329 = vunpack.c.h.b16 %v129
    %v330 = vunpack.c.l.b16 %v130
    %v331 = vunpack.c.h.b16 %v130
    %v332 = vunpack.c.l.b16 %v131
    %v333 = vunpack.c.h.b16 %v131
    %v334 = vunpack.c.l.b16 %v132
    %v335 = vunpack.c.h.b16 %v132
    %v336 = vunpack.c.l.b16 %v133
    %v337 = vunpack.c.h.b16 %v133
    %v338 = vunpack.c.l.b16 %v134
    %v339 = vunpack.c.h.b16 %v134
    %v340 = vunpack.c.l.b16 %v135
    %v341 = vunpack.c.h.b16 %v135
    %v342 = vunpack.c.l.b16 %v136
    %v343 = vunpack.c.h.b16 %v136
    %v344 = vunpack.c.l.b16 %v137
    %v345 = vunpack.c.h.b16 %v137
    %v346 = vunpack.c.l.b16 %v138
    %v347 = vunpack.c.h.b16 %v138
    %v348 = vunpack.c.l.b16 %v139
    %v349 = vunpack.c.h.b16 %v139
    %v350 = vunpack.c.l.b16 %v140
    %v351 = vunpack.c.h.b16 %v140
    %v352 = vunpack.c.l.b16 %v141
    %v353 = vunpack.c.h.b16 %v141
    %v354 = vunpack.c.l.b16 %v142
    %v355 = vunpack.c.h.b16 %v142
    %v356 = vunpack.c.l.b16 %v143
    %v357 = vunpack.c.h.b16 %v143
    %v358 = vpack.c.b16 %v234, %v230
    %v359 = vpack.c.b16 %v235, %v231
    %v360 = vpack.c.b16 %v236, %v232
    %v361 = vpack.c.b16 %v237, %v233
    %v362 = vpack.c.b16 %v242, %v238
    %v363 = vpack.c.b16 %v243, %v239
    %v364 = vpack.c.b16 %v244, %v240
    %v365 = vpack.c.b16 %v245, %v241
    %v366 = vpack.c.b16 %v250, %v246
    %v367 = vpack.c.b16 %v251, %v247
    %v368 = vpack.c.b16 %v252, %v248
    %v369 = vpack.c.b16 %v253, %v249
    %v370 = vpack.c.b16 %v258, %v254
    %v371 = vpack.c.b16 %v259, %v255
    %v372 = vpack.c.b16 %v260, %v256
    %v373 = vpack.c.b16 %v261, %v257
    %v374 = vpack.c.b16 %v266, %v262
    %v375 = vpack.c.b16 %v267, %v263
    %v376 = vpack.c.b16 %v268, %v264
    %v377 = vpack.c.b16 %v269, %v265
    %v378 = vpack.c.b16 %v274, %v270
    %v379 = vpack.c.b16 %v275, %v271
    %v380 = vpack.c.b16 %v276, %v272
    %v381 = vpack.c.b16 %v277, %v273
    %v382 = vpack.c.b16 %v282, %v278
    %v383 = vpack.c.b16 %v283, %v279
    %v384 = vpack.c.b16 %v284, %v280
    %v385 = vpack.c.b16 %v285, %v281
    %v386 = vpack.c.b16 %v290, %v286
    %v387 = vpack.c.b16 %v291, %v287
    %v388 = vpack.c.b16 %v292, %v288
    %v389 = vpack.c.b16 %v293, %v289
    %v390 = vpack.c.b16 %v298, %v294
    %v391 = vpack.c.b16 %v299, %v295
    %v392 = vpack.c.b16 %v300, %v296
    %v393 = vpack.c.b16 %v301, %v297
    %v394 = vpack.c.b16 %v306, %v302
    %v395 = vpack.c.b16 %v307, %v303
    %v396 = vpack.c.b16 %v308, %v304
    %v397 = vpack.c.b16 %v309, %v305
    %v398 = vpack.c.b16 %v314, %v310
    %v399 = vpack.c.b16 %v315, %v311
    %v400 = vpack.c.b16 %v316, %v312
    %v401 = vpack.c.b16 %v317, %v313
    %v402 = vpack.c.b16 %v322, %v318
    %v403 = vpack.c.b16 %v323, %v319
    %v404 = vpack.c.b16 %v324, %v320
    %v405 = vpack.c.b16 %v325, %v321
    %v406 = vpack.c.b16 %v330, %v326
    %v407 = vpack.c.b16 %v331, %v327
    %v408 = vpack.c.b16 %v332, %v328
    %v409 = vpack.c.b16 %v333, %v329
    %v410 = vpack.c.b16 %v338, %v334
    %v411 = vpack.c.b16 %v339, %v335
    %v412 = vpack.c.b16 %v340, %v336
    %v413 = vpack.c.b16 %v341, %v337
    %v414 = vpack.c.b16 %v346, %v342
    %v415 = vpack.c.b16 %v347, %v343
    %v416 = vpack.c.b16 %v348, %v344
    %v417 = vpack.c.b16 %v349, %v345
    %v418 = vpack.c.b16 %v354, %v350
    %v419 = vpack.c.b16 %v355, %v351
    %v420 = vpack.c.b16 %v356, %v352
    %v421 = vpack.c.b16 %v357, %v353
    %486 = vmatprep.subr.bf16.mxu0 %v359
    %487 = vmatpush1.bf16.msra.mxu0 %v358
    %488 = vmatprep.subr.bf16.mxu0 %v363
    %489 = vmatpush1.bf16.msra.mxu0 %v362
    %490 = vmatprep.subr.bf16.mxu0 %v367
    %491 = vmatpush1.bf16.msra.mxu0 %v366
    %492 = vmatprep.subr.bf16.mxu0 %v371
    %493 = vmatpush1.bf16.msra.mxu0 %v370
    %494 = vmatprep.subr.bf16.mxu0 %v375
    %495 = vmatpush1.bf16.msra.mxu0 %v374
    %496 = vmatprep.subr.bf16.mxu0 %v379
    %497 = vmatpush1.bf16.msra.mxu0 %v378
    %498 = vmatprep.subr.bf16.mxu0 %v383
    %499 = vmatpush1.bf16.msra.mxu0 %v382
    %500 = vmatprep.subr.bf16.mxu0 %v387
    %501 = vmatpush1.bf16.msra.mxu0 %v386
    %502 = vmatprep.subr.bf16.mxu0 %v391
    %503 = vmatpush1.bf16.msra.mxu0 %v390
    %504 = vmatprep.subr.bf16.mxu0 %v395
    %505 = vmatpush1.bf16.msra.mxu0 %v394
    %506 = vmatprep.subr.bf16.mxu0 %v399
    %507 = vmatpush1.bf16.msra.mxu0 %v398
    %508 = vmatprep.subr.bf16.mxu0 %v403
    %509 = vmatpush1.bf16.msra.mxu0 %v402
    %510 = vmatprep.subr.bf16.mxu0 %v407
    %511 = vmatpush1.bf16.msra.mxu0 %v406
    %512 = vmatprep.subr.bf16.mxu0 %v411
    %513 = vmatpush1.bf16.msra.mxu0 %v410
    %514 = vmatprep.subr.bf16.mxu0 %v415
    %515 = vmatpush1.bf16.msra.mxu0 %v414
    %516 = vmatprep.subr.bf16.mxu0 %v419
    %517 = vmatpush1.bf16.msra.mxu0 %v418
    %518 = vmatprep.mubr.bf16.mxu0 %v79
    %519 = vmatmul.mubr.bf16.gmra.mrb[0].mxu0 %v78
    %v520 = vpop.f32.mrb[0].mxu0
    %v521 = vadd.f32 %v149, %v520
    %v522 = vpop.f32.mrb[0].mxu0
    %v523 = vadd.f32 %v153, %v522
    %v524 = vpop.f32.mrb[0].mxu0
    %v525 = vpop.f32.mrb[0].mxu0
    %526 = vdwg.mxu0
    %527 = vmatprep.subr.bf16.mxu0 %v361
    %528 = vmatpush1.bf16.msra.mxu0 %v360
    %529 = vmatprep.subr.bf16.mxu0 %v365
    %530 = vmatpush1.bf16.msra.mxu0 %v364
    %531 = vmatprep.subr.bf16.mxu0 %v369
    %532 = vmatpush1.bf16.msra.mxu0 %v368
    %533 = vmatprep.subr.bf16.mxu0 %v373
    %534 = vmatpush1.bf16.msra.mxu0 %v372
    %535 = vmatprep.subr.bf16.mxu0 %v377
    %536 = vmatpush1.bf16.msra.mxu0 %v376
    %537 = vmatprep.subr.bf16.mxu0 %v381
    %538 = vmatpush1.bf16.msra.mxu0 %v380
    %539 = vmatprep.subr.bf16.mxu0 %v385
    %540 = vmatpush1.bf16.msra.mxu0 %v384
    %541 = vmatprep.subr.bf16.mxu0 %v389
    %542 = vmatpush1.bf16.msra.mxu0 %v388
    %543 = vmatprep.subr.bf16.mxu0 %v393
    %544 = vmatpush1.bf16.msra.mxu0 %v392
    %545 = vmatprep.subr.bf16.mxu0 %v397
    %546 = vmatpush1.bf16.msra.mxu0 %v396
    %547 = vmatprep.subr.bf16.mxu0 %v401
    %548 = vmatpush1.bf16.msra.mxu0 %v400
    %549 = vmatprep.subr.bf16.mxu0 %v405
    %550 = vmatpush1.bf16.msra.mxu0 %v404
    %551 = vmatprep.subr.bf16.mxu0 %v409
    %552 = vmatpush1.bf16.msra.mxu0 %v408
    %553 = vmatprep.subr.bf16.mxu0 %v413
    %554 = vmatpush1.bf16.msra.mxu0 %v412
    %555 = vmatprep.subr.bf16.mxu0 %v417
    %556 = vmatpush1.bf16.msra.mxu0 %v416
    %557 = vmatprep.subr.bf16.mxu0 %v421
    %558 = vmatpush1.bf16.msra.mxu0 %v420
    %559 = vmatprep.mubr.bf16.mxu0 %v79
    %560 = vmatmul.mubr.bf16.gmra.mrb[0].mxu0 %v78
    %v561 = vpop.f32.mrb[0].mxu0
    %v562 = vadd.f32 %v157, %v561
    %v563 = vpop.f32.mrb[0].mxu0
    %v564 = vadd.f32 %v161, %v563
    %v565 = vpop.f32.mrb[0].mxu0
    %v566 = vpop.f32.mrb[0].mxu0
    %567 = vdwg.mxu0
    %v568 = vmax.f32 %v521, 0.0
    %v569 = vmax.f32 %v523, 0.0
    %v570 = vmax.f32 %v562, 0.0
    %v571 = vmax.f32 %v564, 0.0
    %v572 = vpack.c.bf16 %v568, %v568
    %v573 = vpack.c.bf16 %v569, %v569
    %v574 = vpack.c.bf16 %v570, %v570
    %v575 = vpack.c.bf16 %v571, %v571
    %v576 = vld [vmem:[#allocation8] sm:$0xf]
    %v577 = vld [vmem:[#allocation8 + $0x4] sm:$0xf]
    %v578 = vld [vmem:[#allocation8 + $0x8] sm:$0xf]
    %v579 = vld [vmem:[#allocation8 + $0xc] sm:$0xf]
    %v580 = vld [vmem:[#allocation8 + $0x10] sm:$0xf]
    %v581 = vld [vmem:[#allocation8 + $0x14] sm:$0xf]
    %v582 = vld [vmem:[#allocation8 + $0x18] sm:$0xf]
    %v583 = vld [vmem:[#allocation8 + $0x1c] sm:$0xf]
    %v584 = vld [vmem:[#allocation8 + $0x20] sm:$0xf]
    %v585 = vld [vmem:[#allocation8 + $0x24] sm:$0xf]
    %v586 = vld [vmem:[#allocation8 + $0x28] sm:$0xf]
    %v587 = vld [vmem:[#allocation8 + $0x2c] sm:$0xf]
    %v588 = vld [vmem:[#allocation8 + $0x30] sm:$0xf]
    %v589 = vld [vmem:[#allocation8 + $0x34] sm:$0xf]
    %v590 = vld [vmem:[#allocation8 + $0x38] sm:$0xf]
    %v591 = vld [vmem:[#allocation8 + $0x3c] sm:$0xf]
    %v592 = vld [vmem:[#allocation8 + $0x40] sm:$0xf]
    %v593 = vld [vmem:[#allocation8 + $0x44] sm:$0xf]
    %v594 = vld [vmem:[#allocation8 + $0x48] sm:$0xf]
    %v595 = vld [vmem:[#allocation8 + $0x4c] sm:$0xf]
    %v596 = vld [vmem:[#allocation8 + $0x50] sm:$0xf]
    %v597 = vld [vmem:[#allocation8 + $0x54] sm:$0xf]
    %v598 = vld [vmem:[#allocation8 + $0x58] sm:$0xf]
    %v599 = vld [vmem:[#allocation8 + $0x5c] sm:$0xf]
    %v600 = vld [vmem:[#allocation8 + $0x60] sm:$0xf]
    %v601 = vld [vmem:[#allocation8 + $0x64] sm:$0xf]
    %v602 = vld [vmem:[#allocation8 + $0x68] sm:$0xf]
    %v603 = vld [vmem:[#allocation8 + $0x6c] sm:$0xf]
    %v604 = vld [vmem:[#allocation8 + $0x70] sm:$0xf]
    %v605 = vld [vmem:[#allocation8 + $0x74] sm:$0xf]
    %v606 = vld [vmem:[#allocation8 + $0x78] sm:$0xf]
    %v607 = vld [vmem:[#allocation8 + $0x7c] sm:$0xf]
    %v608 = vld [vmem:[#allocation8 + $0x80] sm:$0xf]
    %v609 = vld [vmem:[#allocation8 + $0x84] sm:$0xf]
    %v610 = vld [vmem:[#allocation8 + $0x88] sm:$0xf]
    %v611 = vld [vmem:[#allocation8 + $0x8c] sm:$0xf]
    %v612 = vld [vmem:[#allocation8 + $0x90] sm:$0xf]
    %v613 = vld [vmem:[#allocation8 + $0x94] sm:$0xf]
    %v614 = vld [vmem:[#allocation8 + $0x98] sm:$0xf]
    %v615 = vld [vmem:[#allocation8 + $0x9c] sm:$0xf]
    %v616 = vld [vmem:[#allocation8 + $0xa0] sm:$0xf]
    %v617 = vld [vmem:[#allocation8 + $0xa4] sm:$0xf]
    %v618 = vld [vmem:[#allocation8 + $0xa8] sm:$0xf]
    %v619 = vld [vmem:[#allocation8 + $0xac] sm:$0xf]
    %v620 = vld [vmem:[#allocation8 + $0xb0] sm:$0xf]
    %v621 = vld [vmem:[#allocation8 + $0xb4] sm:$0xf]
    %v622 = vld [vmem:[#allocation8 + $0xb8] sm:$0xf]
    %v623 = vld [vmem:[#allocation8 + $0xbc] sm:$0xf]
    %v624 = vld [vmem:[#allocation8 + $0xc0] sm:$0xf]
    %v625 = vld [vmem:[#allocation8 + $0xc4] sm:$0xf]
    %v626 = vld [vmem:[#allocation8 + $0xc8] sm:$0xf]
    %v627 = vld [vmem:[#allocation8 + $0xcc] sm:$0xf]
    %v628 = vld [vmem:[#allocation8 + $0xd0] sm:$0xf]
    %v629 = vld [vmem:[#allocation8 + $0xd4] sm:$0xf]
    %v630 = vld [vmem:[#allocation8 + $0xd8] sm:$0xf]
    %v631 = vld [vmem:[#allocation8 + $0xdc] sm:$0xf]
    %v632 = vld [vmem:[#allocation8 + $0xe0] sm:$0xf]
    %v633 = vld [vmem:[#allocation8 + $0xe4] sm:$0xf]
    %v634 = vld [vmem:[#allocation8 + $0xe8] sm:$0xf]
    %v635 = vld [vmem:[#allocation8 + $0xec] sm:$0xf]
    %v636 = vld [vmem:[#allocation8 + $0xf0] sm:$0xf]
    %v637 = vld [vmem:[#allocation8 + $0xf4] sm:$0xf]
    %v638 = vld [vmem:[#allocation8 + $0xf8] sm:$0xf]
    %v639 = vld [vmem:[#allocation8 + $0xfc] sm:$0xf]
    %v640 = vld [vmem:[%s5] sm:$0x1]
    %v642 = vlaneseq
    %v643 = vshrl.u32 %v642, 7
    %v644 = vsub.s32 0, %v643
    %v645 = vrot.slane %v640, %v644
    %v711 = vunpack.c.l.b16 %v576
    %v712 = vunpack.c.l.b16 %v577
    %v713 = vunpack.c.l.b16 %v578
    %v714 = vunpack.c.l.b16 %v579
    %v715 = vunpack.c.l.b16 %v580
    %v716 = vunpack.c.l.b16 %v581
    %v717 = vunpack.c.l.b16 %v582
    %v718 = vunpack.c.l.b16 %v583
    %v719 = vunpack.c.l.b16 %v584
    %v720 = vunpack.c.l.b16 %v585
    %v721 = vunpack.c.l.b16 %v586
    %v722 = vunpack.c.l.b16 %v587
    %v723 = vunpack.c.l.b16 %v588
    %v724 = vunpack.c.l.b16 %v589
    %v725 = vunpack.c.l.b16 %v590
    %v726 = vunpack.c.l.b16 %v591
    %v727 = vunpack.c.l.b16 %v592
    %v728 = vunpack.c.l.b16 %v593
    %v729 = vunpack.c.l.b16 %v594
    %v730 = vunpack.c.l.b16 %v595
    %v731 = vunpack.c.l.b16 %v596
    %v732 = vunpack.c.l.b16 %v597
    %v733 = vunpack.c.l.b16 %v598
    %v734 = vunpack.c.l.b16 %v599
    %v735 = vunpack.c.l.b16 %v600
    %v736 = vunpack.c.l.b16 %v601
    %v737 = vunpack.c.l.b16 %v602
    %v738 = vunpack.c.l.b16 %v603
    %v739 = vunpack.c.l.b16 %v604
    %v740 = vunpack.c.l.b16 %v605
    %v741 = vunpack.c.l.b16 %v606
    %v742 = vunpack.c.l.b16 %v607
    %v743 = vunpack.c.l.b16 %v608
    %v744 = vunpack.c.l.b16 %v609
    %v745 = vunpack.c.l.b16 %v610
    %v746 = vunpack.c.l.b16 %v611
    %v747 = vunpack.c.l.b16 %v612
    %v748 = vunpack.c.l.b16 %v613
    %v749 = vunpack.c.l.b16 %v614
    %v750 = vunpack.c.l.b16 %v615
    %v751 = vunpack.c.l.b16 %v616
    %v752 = vunpack.c.l.b16 %v617
    %v753 = vunpack.c.l.b16 %v618
    %v754 = vunpack.c.l.b16 %v619
    %v755 = vunpack.c.l.b16 %v620
    %v756 = vunpack.c.l.b16 %v621
    %v757 = vunpack.c.l.b16 %v622
    %v758 = vunpack.c.l.b16 %v623
    %v759 = vunpack.c.l.b16 %v624
    %v760 = vunpack.c.l.b16 %v625
    %v761 = vunpack.c.l.b16 %v626
    %v762 = vunpack.c.l.b16 %v627
    %v763 = vunpack.c.l.b16 %v628
    %v764 = vunpack.c.l.b16 %v629
    %v765 = vunpack.c.l.b16 %v630
    %v766 = vunpack.c.l.b16 %v631
    %v767 = vunpack.c.l.b16 %v632
    %v768 = vunpack.c.l.b16 %v633
    %v769 = vunpack.c.l.b16 %v634
    %v770 = vunpack.c.l.b16 %v635
    %v771 = vunpack.c.l.b16 %v636
    %v772 = vunpack.c.l.b16 %v637
    %v773 = vunpack.c.l.b16 %v638
    %v774 = vunpack.c.l.b16 %v639
    %v775 = vpack.c.b16 %v712, %v711
    %v776 = vpack.c.b16 %v714, %v713
    %v777 = vpack.c.b16 %v716, %v715
    %v778 = vpack.c.b16 %v718, %v717
    %v779 = vpack.c.b16 %v720, %v719
    %v780 = vpack.c.b16 %v722, %v721
    %v781 = vpack.c.b16 %v724, %v723
    %v782 = vpack.c.b16 %v726, %v725
    %v783 = vpack.c.b16 %v728, %v727
    %v784 = vpack.c.b16 %v730, %v729
    %v785 = vpack.c.b16 %v732, %v731
    %v786 = vpack.c.b16 %v734, %v733
    %v787 = vpack.c.b16 %v736, %v735
    %v788 = vpack.c.b16 %v738, %v737
    %v789 = vpack.c.b16 %v740, %v739
    %v790 = vpack.c.b16 %v742, %v741
    %v791 = vpack.c.b16 %v744, %v743
    %v792 = vpack.c.b16 %v746, %v745
    %v793 = vpack.c.b16 %v748, %v747
    %v794 = vpack.c.b16 %v750, %v749
    %v795 = vpack.c.b16 %v752, %v751
    %v796 = vpack.c.b16 %v754, %v753
    %v797 = vpack.c.b16 %v756, %v755
    %v798 = vpack.c.b16 %v758, %v757
    %v799 = vpack.c.b16 %v760, %v759
    %v800 = vpack.c.b16 %v762, %v761
    %v801 = vpack.c.b16 %v764, %v763
    %v802 = vpack.c.b16 %v766, %v765
    %v803 = vpack.c.b16 %v768, %v767
    %v804 = vpack.c.b16 %v770, %v769
    %v805 = vpack.c.b16 %v772, %v771
    %v806 = vpack.c.b16 %v774, %v773
    %839 = vmatprep.subr.bf16.mxu0 0
    %840 = vmatpush1.bf16.msra.mxu0 %v775
    %841 = vmatprep.subr.bf16.mxu0 0
    %842 = vmatpush1.bf16.msra.mxu0 %v776
    %843 = vmatprep.subr.bf16.mxu0 0
    %844 = vmatpush1.bf16.msra.mxu0 %v777
    %845 = vmatprep.subr.bf16.mxu0 0
    %846 = vmatpush1.bf16.msra.mxu0 %v778
    %847 = vmatprep.subr.bf16.mxu0 0
    %848 = vmatpush1.bf16.msra.mxu0 %v779
    %849 = vmatprep.subr.bf16.mxu0 0
    %850 = vmatpush1.bf16.msra.mxu0 %v780
    %851 = vmatprep.subr.bf16.mxu0 0
    %852 = vmatpush1.bf16.msra.mxu0 %v781
    %853 = vmatprep.subr.bf16.mxu0 0
    %854 = vmatpush1.bf16.msra.mxu0 %v782
    %855 = vmatprep.subr.bf16.mxu0 0
    %856 = vmatpush1.bf16.msra.mxu0 %v783
    %857 = vmatprep.subr.bf16.mxu0 0
    %858 = vmatpush1.bf16.msra.mxu0 %v784
    %859 = vmatprep.subr.bf16.mxu0 0
    %860 = vmatpush1.bf16.msra.mxu0 %v785
    %861 = vmatprep.subr.bf16.mxu0 0
    %862 = vmatpush1.bf16.msra.mxu0 %v786
    %863 = vmatprep.subr.bf16.mxu0 0
    %864 = vmatpush1.bf16.msra.mxu0 %v787
    %865 = vmatprep.subr.bf16.mxu0 0
    %866 = vmatpush1.bf16.msra.mxu0 %v788
    %867 = vmatprep.subr.bf16.mxu0 0
    %868 = vmatpush1.bf16.msra.mxu0 %v789
    %869 = vmatprep.subr.bf16.mxu0 0
    %870 = vmatpush1.bf16.msra.mxu0 %v790
    %871 = vmatprep.mubr.bf16.mxu0 %v573
    %872 = vmatmul.mubr.bf16.gmra.mrb[0].mxu0 %v572
    %v873 = vpop.f32.mrb[0].mxu0
    %v874 = vadd.f32 %v645, %v873
    %v875 = vpop.f32.mrb[0].mxu0
    %v876 = vpop.f32.mrb[0].mxu0
    %v877 = vpop.f32.mrb[0].mxu0
    %878 = vdwg.mxu0
    %879 = vmatprep.subr.bf16.mxu0 0
    %880 = vmatpush1.bf16.msra.mxu0 %v791
    %881 = vmatprep.subr.bf16.mxu0 0
    %882 = vmatpush1.bf16.msra.mxu0 %v792
    %883 = vmatprep.subr.bf16.mxu0 0
    %884 = vmatpush1.bf16.msra.mxu0 %v793
    %885 = vmatprep.subr.bf16.mxu0 0
    %886 = vmatpush1.bf16.msra.mxu0 %v794
    %887 = vmatprep.subr.bf16.mxu0 0
    %888 = vmatpush1.bf16.msra.mxu0 %v795
    %889 = vmatprep.subr.bf16.mxu0 0
    %890 = vmatpush1.bf16.msra.mxu0 %v796
    %891 = vmatprep.subr.bf16.mxu0 0
    %892 = vmatpush1.bf16.msra.mxu0 %v797
    %893 = vmatprep.subr.bf16.mxu0 0
    %894 = vmatpush1.bf16.msra.mxu0 %v798
    %895 = vmatprep.subr.bf16.mxu0 0
    %896 = vmatpush1.bf16.msra.mxu0 %v799
    %897 = vmatprep.subr.bf16.mxu0 0
    %898 = vmatpush1.bf16.msra.mxu0 %v800
    %899 = vmatprep.subr.bf16.mxu0 0
    %900 = vmatpush1.bf16.msra.mxu0 %v801
    %901 = vmatprep.subr.bf16.mxu0 0
    %902 = vmatpush1.bf16.msra.mxu0 %v802
    %903 = vmatprep.subr.bf16.mxu0 0
    %904 = vmatpush1.bf16.msra.mxu0 %v803
    %905 = vmatprep.subr.bf16.mxu0 0
    %906 = vmatpush1.bf16.msra.mxu0 %v804
    %907 = vmatprep.subr.bf16.mxu0 0
    %908 = vmatpush1.bf16.msra.mxu0 %v805
    %909 = vmatprep.subr.bf16.mxu0 0
    %910 = vmatpush1.bf16.msra.mxu0 %v806
    %911 = vmatprep.mubr.bf16.mxu0 %v575
    %912 = vmatmul.mubr.bf16.gmra.mrb[0].mxu0 %v574
    %v913 = vpop.f32.mrb[0].mxu0
    %v914 = vadd.f32 %v874, %v913
    %v915 = vpop.f32.mrb[0].mxu0
    %v916 = vpop.f32.mrb[0].mxu0
    %v917 = vpop.f32.mrb[0].mxu0
    %918 = vdwg.mxu0
    %v919 = vmax.f32 %v914, 0.0
    %920 = vst [vmem:[#allocation10] sm:$0xff] %v919
    // Predicated region
    $region42: #{tpu_custom_call.1} parent=1 // pred_check
      _
    $region43: #{tpu_custom_call.1} parent=1 // pred_check_branch
      %922 = sbr.rel (0) target = $region45
    $region44: #{tpu_custom_call.1} parent=1 // pred_region
      %s924 = ssub.s32 128, 128
      %925 = vsyncadd [#allocation4], %s924
      %s927 = sshll.u32 [#allocation10], 4
      %s928 = int_to_ptr.vmem [resolvable:$true] %s927
      %930 = dma.vmem_to_hbm [thread:$0]  %s928, 128, %s6, [#allocation4]
    $region45: #{tpu_custom_call.1} parent=1 // pred_fallthru
      _
    // Predicated region
    $region46: #{tpu_custom_call.1} parent=1 // pred_check
      _
    $region47: #{tpu_custom_call.1} parent=1 // pred_check_branch
      %932 = sbr.rel (0) target = $region49
    $region48: #{tpu_custom_call.1} parent=1 // pred_region
      %933 = dma.done [#allocation4], 128
    $region49: #{tpu_custom_call.1} parent=1 // pred_fallthru
      _
    %934 = vsyncpa [#allocation3], 1
    %935 = vsyncpa [#allocation6], 1
    %936 = vsyncpa [#allocation9], 1
    %937 = vsyncpa [#allocation4], 1

</llo_original>
